<compile_context>
chip_gen: v6e
topology: v6e:2x2x1
jax: 0.10.0
libtpu: 0.0.40
codegen_flags: <defaults>
</compile_context>

<pallas_src>
import functools
import math

import jax
import jax.numpy as jnp
from jax.experimental import pallas as pl
from jax.experimental.pallas import tpu as pltpu


def _downsample_kernel(x_ref, w_ref, b_ref, o_ref):
    # x_ref: (1, tile_h, 2, W2, 2C)   (b, h, ph, w, pw*c) slab of the NHWC input
    # w_ref: (2, 2C, Cp)              1x1-conv weight, rows ordered (ph, pw, c)
    # b_ref: (1, Cp) f32              bias (lane-padded, padding sliced off below)
    # o_ref: (1, C_out, tile_h*W2)    channel-major output (NCHW with h*w flat)
    _, th, _, w2, k2 = x_ref.shape
    c_out = o_ref.shape[1]
    # Index the ref directly (no full-tile materialization). NOTE: the
    # (th, W2, 2C) -> (th*W2, 2C) collapse is a free view when W2 is a multiple
    # of the sublane tile (8 f32 / 16 bf16); otherwise Mosaic inserts a per-tile
    # relayout copy (correct, just slower) -- prefer W2 aligned to 8/16.
    x0 = x_ref[0, :, 0].reshape(th * w2, k2)   # ph = 0 pixels of the 2x2 patches
    x1 = x_ref[0, :, 1].reshape(th * w2, k2)   # ph = 1 pixels
    acc = jnp.dot(x0, w_ref[0], preferred_element_type=jnp.float32)
    acc = acc + jnp.dot(x1, w_ref[1], preferred_element_type=jnp.float32)
    acc = acc + b_ref[...]                     # bias kept f32: no per-tile cast
    # Emit channel-major directly: XLU transpose of the (tile_p, Cp) accumulator.
    # The Cp padding is sliced off here, so it never costs HBM bytes.
    acc_t = jnp.transpose(acc)                 # (Cp, tile_h*W2)
    o_ref[0] = acc_t[:c_out].astype(o_ref.dtype)


def _vmem_limit_bytes():
    """Generation-aware VMEM limit (v5e/v6e: 128 MiB, v7x: 64 MiB physical)."""
    cap = 64 * 1024 * 1024                      # conservative default (v7x-sized)
    try:
        cap = int(pltpu.get_tpu_info().vmem_capacity_bytes)
    except Exception:
        pass
    return max(16 << 20, min(int(cap * 0.78), cap - (8 << 20)))


def _pick_tile_h(B, H2, W2, per_row_bytes, fixed_bytes, budget_bytes):
    """Output-H rows per grid step, sized from a VMEM budget.

    Legality: the output block's lane dim (tile_h*W2) must be a multiple of 128
    or equal to the full H2*W2 extent.
    """
    th_cap = max(1, (budget_bytes - fixed_bytes) // max(per_row_bytes, 1))
    g = 128 // math.gcd(W2, 128)                # tile_h granule for lane-dense out
    nh_min = max(1, -(-4 // B))                 # aim for >= ~4 total grid steps
    th_want = max(1, min(th_cap, max(1, H2 // nh_min)))
    th = (th_want // g) * g
    if th >= g:
        t = th
        while t > g and H2 % t != 0:            # prefer an exact divisor of H2
            t -= g
        return t if H2 % t == 0 else th         # else: cdiv grid, masked tail block
    if H2 <= th_cap or H2 <= g:
        return H2                               # whole-H2 tile (always legal)
    return g                                    # best effort (limit already raised)


@functools.partial(jax.jit, static_argnames=("compute_dtype",))
def downsample(x, weight, bias, compute_dtype=None):
    """x: (B, C, H, W) NCHW; weight: (C_out, 4C, 1, 1); bias: (C_out,).
    Returns (B, C_out, H//2, W//2) NCHW, matching the PyTorch Downsample module.
    compute_dtype: optional reduced-precision compute dtype (e.g. jnp.bfloat16);
    accumulation stays f32 and the output keeps x.dtype."""
    B, C, H, W = x.shape
    assert H % 2 == 0 and W % 2 == 0, "Downsample needs even spatial dims"
    H2, W2 = H // 2, W // 2
    K = 4 * C
    C_out = weight.shape[0]
    assert weight.shape == (C_out, K, 1, 1)

    out_dt = x.dtype
    cmp_dt = jnp.dtype(compute_dtype) if compute_dtype is not None else jnp.dtype(x.dtype)
    x_bytes = cmp_dt.itemsize
    out_bytes = jnp.dtype(out_dt).itemsize

    # MXU-friendly padded output-channel count (VMEM-only; never reaches HBM).
    Cp = ((C_out + 127) // 128) * 128

    # --- layout glue: ONE transpose to NHWC; everything after is a free reshape.
    # TODO(synk): adopt NHWC at the module boundary to drop this last extra pass.
    x_nhwc = jnp.transpose(x, (0, 2, 3, 1))
    if cmp_dt != x.dtype:
        x_nhwc = x_nhwc.astype(cmp_dt)                     # fuses into the transpose
    x5 = x_nhwc.reshape(B, H2, 2, W2, 2 * C)               # (b, h, ph, w, pw*c)

    # --- weight: torch k = 4c + 2*ph + pw  ->  rows ordered (ph, pw, c), padded.
    wt = weight.reshape(C_out, C, 2, 2)                    # (co, c, ph, pw)
    wk = jnp.transpose(wt, (2, 3, 1, 0)).reshape(2, 2 * C, C_out).astype(cmp_dt)
    if Cp != C_out:
        wk = jnp.pad(wk, ((0, 0), (0, 0), (0, Cp - C_out)))
    b2 = bias.astype(jnp.float32)
    if Cp != C_out:
        b2 = jnp.pad(b2, (0, Cp - C_out))
    b2 = b2.reshape(1, Cp)

    # --- VMEM-budgeted tile sizing (accumulator + double buffers all counted).
    vmem_limit = _vmem_limit_bytes()
    per_row = (2 * W2 * K * x_bytes            # x tile, double-buffered
               + 2 * W2 * C_out * out_bytes    # out tile, double-buffered
               + 2 * W2 * Cp * 4)              # f32 accumulator + its transpose
    fixed = 2 * K * Cp * x_bytes + 2 * Cp * 4 + (2 << 20)  # weight/bias buffers + slack
    tile_h = _pick_tile_h(B, H2, W2, per_row, fixed, vmem_limit)
    nh = pl.cdiv(H2, tile_h)
    tile_p = tile_h * W2

    flops = 2 * B * H2 * W2 * K * Cp
    bytes_accessed = (x5.size * x_bytes + wk.size * x_bytes + b2.size * 4
                      + B * C_out * H2 * W2 * out_bytes)

    out3 = pl.pallas_call(
        _downsample_kernel,
        out_shape=jax.ShapeDtypeStruct((B, C_out, H2 * W2), out_dt),
        grid_spec=pltpu.PrefetchScalarGridSpec(
            num_scalar_prefetch=0,
            grid=(B, nh),
            in_specs=[
                # 2x2 space-to-depth gather is done by the block DMA itself.
                pl.BlockSpec((1, tile_h, 2, W2, 2 * C), lambda b, i: (b, i, 0, 0, 0)),
                pl.BlockSpec((2, 2 * C, Cp), lambda b, i: (0, 0, 0)),  # resident weight
                pl.BlockSpec((1, Cp), lambda b, i: (0, 0)),            # resident bias
            ],
            out_specs=pl.BlockSpec((1, C_out, tile_p), lambda b, i: (b, 0, i)),
        ),
        compiler_params=pltpu.CompilerParams(
            dimension_semantics=("parallel", "parallel"),
            vmem_limit_bytes=int(vmem_limit),
        ),
        cost_estimate=pl.CostEstimate(
            flops=int(flops), transcendentals=0, bytes_accessed=int(bytes_accessed)),
    )(x5, wk, b2)

    # Kernel already emitted channel-major: this reshape to NCHW is free metadata.
    return out3.reshape(B, C_out, H2, W2)


if __name__ == "__main__":
    B, C, H, W = 2, 4, 16, 16
    key = jax.random.PRNGKey(0)
    kx, kw, kb = jax.random.split(key, 3)

    x = jax.random.normal(kx, (B, C, H, W), dtype=jnp.float32)
    # Deterministic synthetic Conv2d(4C, C, kernel_size=1) parameters.
    weight = jax.random.normal(kw, (C, 4 * C, 1, 1), dtype=jnp.float32) * 0.1
    bias = jax.random.normal(kb, (C,), dtype=jnp.float32) * 0.1

    out = downsample(x, weight, bias)
    out = jax.block_until_ready(out)

    # Pure-JAX reference (same semantics as the PyTorch module).
    xr = x.reshape(B, C, H // 2, 2, W // 2, 2).transpose(0, 1, 3, 5, 2, 4)
    xr = xr.reshape(B, 4 * C, H // 2, W // 2)
    ref = jnp.einsum("bkhw,ok->bohw", xr, weight.reshape(C, 4 * C)) \
        + bias[None, :, None, None]

    assert out.shape == (B, C, H // 2, W // 2)
    assert jnp.allclose(out, ref, atol=1e-4, rtol=1e-4)
    print("KERNEL_OK")
</pallas_src>

<mosaic_0001>
module attributes {stable_mosaic.version = 11 : i64} {
  func.func @_downsample_kernel(%arg0: i32, %arg1: i32, %arg2: memref<1x8x2x8x8xf32, #tpu.memory_space<vmem>>, %arg3: memref<2x8x128xf32, #tpu.memory_space<vmem>>, %arg4: memref<1x128xf32, #tpu.memory_space<vmem>>, %arg5: memref<1x4x64xf32, #tpu.memory_space<vmem>>) attributes {dimension_semantics = [#tpu.dimension_semantics<parallel>, #tpu.dimension_semantics<parallel>], iteration_bounds = array<i64: 2, 1>, scalar_prefetch = 0 : i64, scratch_operands = 0 : i64, tpu.core_type = #tpu.core_type<tc>, window_params = [{transform_indices = @transform_0, window_bounds = array<i64: 1, 8, 2, 8, 8>}, {pipeline_mode = #tpu.pipeline_mode<synchronous>, transform_indices = @transform_1, window_bounds = array<i64: 2, 8, 128>}, {pipeline_mode = #tpu.pipeline_mode<synchronous>, transform_indices = @transform_2, window_bounds = array<i64: 1, 128>}, {transform_indices = @transform_3, window_bounds = array<i64: 1, 4, 64>}]} {
    %c0 = arith.constant 0 : index
    %c0_0 = arith.constant 0 : index
    %c0_1 = arith.constant 0 : index
    %c0_2 = arith.constant 0 : index
    %c0_3 = arith.constant 0 : index
    %0 = vector.load %arg2[%c0, %c0_0, %c0_1, %c0_2, %c0_3] : memref<1x8x2x8x8xf32, #tpu.memory_space<vmem>>, vector<1x8x1x8x8xf32>
    %1 = vector.shape_cast %0 : vector<1x8x1x8x8xf32> to vector<8x8x8xf32>
    %2 = vector.shape_cast %1 : vector<8x8x8xf32> to vector<64x8xf32>
    %c0_4 = arith.constant 0 : index
    %c0_5 = arith.constant 0 : index
    %c1 = arith.constant 1 : index
    %c0_6 = arith.constant 0 : index
    %c0_7 = arith.constant 0 : index
    %3 = vector.load %arg2[%c0_4, %c0_5, %c1, %c0_6, %c0_7] : memref<1x8x2x8x8xf32, #tpu.memory_space<vmem>>, vector<1x8x1x8x8xf32>
    %4 = vector.shape_cast %3 : vector<1x8x1x8x8xf32> to vector<8x8x8xf32>
    %5 = vector.shape_cast %4 : vector<8x8x8xf32> to vector<64x8xf32>
    %c0_8 = arith.constant 0 : index
    %c0_9 = arith.constant 0 : index
    %c0_10 = arith.constant 0 : index
    %6 = vector.load %arg3[%c0_8, %c0_9, %c0_10] : memref<2x8x128xf32, #tpu.memory_space<vmem>>, vector<1x8x128xf32>
    %7 = vector.shape_cast %6 : vector<1x8x128xf32> to vector<8x128xf32>
    %cst = arith.constant dense<0.000000e+00> : vector<64x128xf32>
    %8 = tpu.matmul %2, %7, %cst {dimension_numbers = #tpu.dot_dimension_numbers<[1], [0], [0], [1], [0, 0, 1, 1], [], []>} : vector<64x8xf32>, vector<8x128xf32>, vector<64x128xf32> -> vector<64x128xf32>
    %c1_11 = arith.constant 1 : index
    %c0_12 = arith.constant 0 : index
    %c0_13 = arith.constant 0 : index
    %9 = vector.load %arg3[%c1_11, %c0_12, %c0_13] : memref<2x8x128xf32, #tpu.memory_space<vmem>>, vector<1x8x128xf32>
    %10 = vector.shape_cast %9 : vector<1x8x128xf32> to vector<8x128xf32>
    %cst_14 = arith.constant dense<0.000000e+00> : vector<64x128xf32>
    %11 = tpu.matmul %5, %10, %cst_14 {dimension_numbers = #tpu.dot_dimension_numbers<[1], [0], [0], [1], [0, 0, 1, 1], [], []>} : vector<64x8xf32>, vector<8x128xf32>, vector<64x128xf32> -> vector<64x128xf32>
    %12 = arith.addf %8, %11 : vector<64x128xf32>
    %c0_15 = arith.constant 0 : index
    %c0_16 = arith.constant 0 : index
    %13 = vector.load %arg4[%c0_15, %c0_16] : memref<1x128xf32, #tpu.memory_space<vmem>>, vector<1x128xf32>
    %14 = vector.broadcast %13 : vector<1x128xf32> to vector<64x128xf32>
    %15 = arith.addf %12, %14 : vector<64x128xf32>
    %16 = tpu.transpose %15, [1, 0] : vector<64x128xf32> -> vector<128x64xf32>
    %17 = vector.extract_strided_slice %16 {offsets = [0, 0], sizes = [4, 64], strides = [1, 1]} : vector<128x64xf32> to vector<4x64xf32>
    %c0_17 = arith.constant 0 : index
    %c0_18 = arith.constant 0 : index
    %c0_19 = arith.constant 0 : index
    %18 = vector.load %arg5[%c0_17, %c0_18, %c0_19] : memref<1x4x64xf32, #tpu.memory_space<vmem>>, vector<1x4x64xf32>
    %19 = vector.shape_cast %18 : vector<1x4x64xf32> to vector<4x64xf32>
    %20 = vector.shape_cast %17 : vector<4x64xf32> to vector<1x4x64xf32>
    tpu.vector_store %arg5[%c0_17, %c0_18, %c0_19], %20 {strides = array<i32>} : memref<1x4x64xf32, #tpu.memory_space<vmem>>, vector<1x4x64xf32>,
    return
  }
  func.func @transform_0(%arg0: i32, %arg1: i32) -> (i32, i32, i32, i32, i32) {
    %c0_i32 = arith.constant 0 : i32
    %c0_i32_0 = arith.constant 0 : i32
    %c0_i32_1 = arith.constant 0 : i32
    %c0_i32_2 = arith.constant 0 : i32
    return %arg0, %arg1, %c0_i32, %c0_i32_0, %c0_i32_1 : i32, i32, i32, i32, i32
  }
  func.func @transform_1(%arg0: i32, %arg1: i32) -> (i32, i32, i32) {
    %c0_i32 = arith.constant 0 : i32
    %c0_i32_0 = arith.constant 0 : i32
    %c0_i32_1 = arith.constant 0 : i32
    %c0_i32_2 = arith.constant 0 : i32
    return %c0_i32, %c0_i32_0, %c0_i32_1 : i32, i32, i32
  }
  func.func @transform_2(%arg0: i32, %arg1: i32) -> (i32, i32) {
    %c0_i32 = arith.constant 0 : i32
    %c0_i32_0 = arith.constant 0 : i32
    %c0_i32_1 = arith.constant 0 : i32
    return %c0_i32, %c0_i32_0 : i32, i32
  }
  func.func @transform_3(%arg0: i32, %arg1: i32) -> (i32, i32, i32) {
    %c0_i32 = arith.constant 0 : i32
    %c0_i32_0 = arith.constant 0 : i32
    return %arg0, %c0_i32, %arg1 : i32, i32, i32
  }
}

</mosaic_0001>

<llo_original>
// kernel: downsample.1
$region0: #{downsample.1}
  #allocation0 [shape = 'u32[]', space=smem, size = 0x4, offset = 0x4, fixed_abs, tag = 'smem constant byte address 0x4 - core index']
  #allocation1 [shape = 'u32[144,128]{1,0:T(1,128)}', space=vmem, size = 0x12000, scoped, tag = 'internal scratch']
  %s0 = inlined_call_operand.vmem [shape: f32[2,8,2,8,8], index: 0, kind: input, shape index: {}]
  %s1 = inlined_call_operand.vmem [shape: f32[2,8,128], index: 1, kind: input, shape index: {}]
  %s2 = inlined_call_operand.vmem [shape: f32[1,128], index: 2, kind: input, shape index: {}]
  %s3 = inlined_call_operand.vmem [shape: f32[2,4,64], index: 3, kind: output, shape index: {}]
  %s4 = sld [smem:[#allocation0]]
  $region45: #{downsample.1} parent=0
    _
  %s6 = ssub.s32 1, %s4
  %s7 = scalar_select 0, %s6, %s4
  loop: start=0, step=1, limit=4
  $region2: #{downsample.1} parent=0 // loop_pre_header
    _
  $region3: #{downsample.1} parent=0 // loop_header
    %s9 = sphi 0, %s13
    %p10 = scmp.ge.s32.totalorder %s9, 4
    %s16 = sphi 0, %s28
    %s17 = sphi 0, %s24
    %s18 = sphi 0, %s16
    %s19 = sphi 0, %s17
    %s20 = sphi 0, %s18
    %s21 = sphi 0, %s19
    %s33 = sphi 0, %s35
    %s36 = sphi 0, %s33
    %s37 = sphi 0, %s36
    %s53 = sphi 0, %s37
    %s57 = sphi 0, %s57
    %s59 = sphi 0, %s57
    %s60 = sphi 0, %s59
    %s74 = sphi 0, %s60
    %s78 = sphi 0, %s78
    %s80 = sphi 0, %s78
    %s81 = sphi 0, %s80
    %s95 = sphi 0, %s81
    %s103 = sphi 0, %s105
    %s106 = sphi 0, %s103
    %s107 = sphi 0, %s106
    %s123 = sphi 0, %s107
  $region4: #{downsample.1} parent=0 // loop_header_branch
    %12 = sbr.rel (%p10) target = $region8
  $region5: #{downsample.1} parent=0 // loop_body
    %s14 = ssub.s32 %s9, 1
    %s15 = ssub.s32 %s9, 2
    %s22 = sadd.s32 1, %s17
    %p23 = scmp.ge.s32.totalorder %s22, 1
    %s24 = scalar_select %p23, 0, %s22
    %s25 = sadd.s32 1, %s16
    %s26 = scalar_select %p23, %s25, %s16
    %p27 = scmp.ge.s32.totalorder %s26, 2
    %s28 = scalar_select %p27, 0, %s26
    %s29 = ssub.s32 %s16, %s28
    %s30 = ssub.s32 %s17, %s24
    %s31 = sor.u32 %s29, %s30
    %p32 = scmp.eq.s32.totalorder %s31, 0
    %s34 = sadd.s32 %s33, 1
    %s35 = scalar_select %p32, %s33, %s34
    %p38 = pneg %p32
    %p39 = scmp.eq.s32.totalorder %s9, 1
    %p40 = por %p38, %p39
    %p41 = scmp.ne.s32.totalorder %s33, %s36
    %p42 = scmp.eq.s32.totalorder %s9, 0
    %p43 = por %p41, %p42
    %p44 = scmp.ne.s32.totalorder %s33, %s36
    %p45 = scmp.eq.s32.totalorder %s14, 1
    %p46 = por %p44, %p45
    %p47 = scmp.ne.s32.totalorder %s36, %s37
    %p48 = scmp.eq.s32.totalorder %s14, 0
    %p49 = por %p47, %p48
    %p50 = scmp.ne.s32.totalorder %s36, %s37
    %p51 = scmp.eq.s32.totalorder %s15, 1
    %p52 = por %p50, %p51
    %p54 = scmp.ne.s32.totalorder %s37, %s53
    %p55 = scmp.eq.s32.totalorder %s15, 0
    %p56 = por %p54, %p55
    %s58 = sadd.s32 %s57, 1
    %p61 = scmp.eq.s32.totalorder %s9, 1
    %p62 = scmp.ne.s32.totalorder %s57, %s59
    %p63 = scmp.eq.s32.totalorder %s9, 0
    %p64 = por %p62, %p63
    %p65 = scmp.ne.s32.totalorder %s57, %s59
    %p66 = scmp.eq.s32.totalorder %s14, 1
    %p67 = por %p65, %p66
    %p68 = scmp.ne.s32.totalorder %s59, %s60
    %p69 = scmp.eq.s32.totalorder %s14, 0
    %p70 = por %p68, %p69
    %p71 = scmp.ne.s32.totalorder %s59, %s60
    %p72 = scmp.eq.s32.totalorder %s15, 1
    %p73 = por %p71, %p72
    %p75 = scmp.ne.s32.totalorder %s60, %s74
    %p76 = scmp.eq.s32.totalorder %s15, 0
    %p77 = por %p75, %p76
    %s79 = sadd.s32 %s78, 1
    %p82 = scmp.eq.s32.totalorder %s9, 1
    %p83 = scmp.ne.s32.totalorder %s78, %s80
    %p84 = scmp.eq.s32.totalorder %s9, 0
    %p85 = por %p83, %p84
    %p86 = scmp.ne.s32.totalorder %s78, %s80
    %p87 = scmp.eq.s32.totalorder %s14, 1
    %p88 = por %p86, %p87
    %p89 = scmp.ne.s32.totalorder %s80, %s81
    %p90 = scmp.eq.s32.totalorder %s14, 0
    %p91 = por %p89, %p90
    %p92 = scmp.ne.s32.totalorder %s80, %s81
    %p93 = scmp.eq.s32.totalorder %s15, 1
    %p94 = por %p92, %p93
    %p96 = scmp.ne.s32.totalorder %s81, %s95
    %p97 = scmp.eq.s32.totalorder %s15, 0
    %p98 = por %p96, %p97
    %s99 = ssub.s32 %s16, %s28
    %s100 = ssub.s32 %s17, %s24
    %s101 = sor.u32 %s99, %s100
    %p102 = scmp.eq.s32.totalorder %s101, 0
    %s104 = sadd.s32 %s103, 1
    %s105 = scalar_select %p102, %s103, %s104
    %p108 = pneg %p102
    %p109 = scmp.eq.s32.totalorder %s9, 1
    %p110 = por %p108, %p109
    %p111 = scmp.ne.s32.totalorder %s103, %s106
    %p112 = scmp.eq.s32.totalorder %s9, 0
    %p113 = por %p111, %p112
    %p114 = scmp.ne.s32.totalorder %s103, %s106
    %p115 = scmp.eq.s32.totalorder %s14, 1
    %p116 = por %p114, %p115
    %p117 = scmp.ne.s32.totalorder %s106, %s107
    %p118 = scmp.eq.s32.totalorder %s14, 0
    %p119 = por %p117, %p118
    %p120 = scmp.ne.s32.totalorder %s106, %s107
    %p121 = scmp.eq.s32.totalorder %s15, 1
    %p122 = por %p120, %p121
    %p124 = scmp.ne.s32.totalorder %s107, %s123
    %p125 = scmp.eq.s32.totalorder %s15, 0
    %p126 = por %p124, %p125
    %p127 = scmp.le.s32.totalorder 1, %s9
    %p128 = scmp.lt.s32.totalorder %s9, 3
    %p129 = pnand %p127, %p128
    %p130 = pneg %p129
    // Predicated region
    $region9: #{downsample.1} parent=5 // pred_check
      _
    $region10: #{downsample.1} parent=5 // pred_check_branch
      %132 = sbr.rel (%p129) target = $region12
    $region11: #{downsample.1} parent=5 // pred_region
      %s133 = ssub.s32 %s9, 1
      // Predicated region
      $region13: #{downsample.1} parent=11 // pred_check
        %p134 = pneg %p70
      $region14: #{downsample.1} parent=11 // pred_check_branch
        %136 = sbr.rel (%p134) target = $region16
      $region15: #{downsample.1} parent=11 // pred_region
        _
      $region16: #{downsample.1} parent=11 // pred_fallthru
        _
      // Predicated region
      $region17: #{downsample.1} parent=11 // pred_check
        %p137 = pneg %p91
      $region18: #{downsample.1} parent=11 // pred_check_branch
        %139 = sbr.rel (%p137) target = $region20
      $region19: #{downsample.1} parent=11 // pred_region
        _
      $region20: #{downsample.1} parent=11 // pred_fallthru
        _
    $region12: #{downsample.1} parent=5 // pred_fallthru
      _
    %p140 = scmp.lt.s32.totalorder %s9, 2
    // Predicated region
    $region21: #{downsample.1} parent=5 // pred_check
      %p141 = pneg %p140
    $region22: #{downsample.1} parent=5 // pred_check_branch
      %143 = sbr.rel (%p141) target = $region24
    $region23: #{downsample.1} parent=5 // pred_region
      // Predicated region
      $region25: #{downsample.1} parent=23 // pred_check
        %p144 = pneg %p43
      $region26: #{downsample.1} parent=23 // pred_check_branch
        %146 = sbr.rel (%p144) target = $region28
      $region27: #{downsample.1} parent=23 // pred_region
        %s147 = smul.u32 8, %s17
        %p148 = scmp.lt.s32.totalorder %s16, 1
        %s149 = scalar_select %p148, %s16, 1
        %p150 = scmp.lt.s32.totalorder %s147, 7
        %s151 = scalar_select %p150, %s147, 7
        %s152 = smul.addr %s151, 2
        %s153 = smul.addr %s149, 16
        %s154 = sadd.s32 %s152, %s153
        %s155 = smul.addr %s154, 8
        %s156 = scalar_lea.vmem %s0, %s155
        %s157 = smul.u32 8, %s17
      $region28: #{downsample.1} parent=23 // pred_fallthru
        _
    $region24: #{downsample.1} parent=5 // pred_fallthru
      _
    %p158 = scmp.le.s32.totalorder 1, %s9
    %p159 = scmp.lt.s32.totalorder %s9, 3
    %p160 = pnand %p158, %p159
    %p161 = pneg %p160
    // Predicated region
    $region29: #{downsample.1} parent=5 // pred_check
      _
    $region30: #{downsample.1} parent=5 // pred_check_branch
      %163 = sbr.rel (%p160) target = $region32
    $region31: #{downsample.1} parent=5 // pred_region
      %s164 = ssub.s32 %s9, 1
      %s165 = smul.u32 8, %s19
      %p166 = scmp.lt.s32.totalorder %s18, 1
      %s167 = scalar_select %p166, %s18, 1
      %p168 = scmp.lt.s32.totalorder %s165, 7
      %s169 = scalar_select %p168, %s165, 7
      %s170 = smul.addr %s169, 2
      %s171 = smul.addr %s167, 16
      %s172 = sadd.s32 %s170, %s171
      %s173 = smul.addr %s172, 8
      %s174 = scalar_lea.vmem %s0, %s173
      %p175 = pneg %p49
      %p176 = pneg %p46
      %p177 = pneg %p70
      %p178 = pneg %p67
      %p179 = pneg %p91
      %p180 = pneg %p88
      %p181 = pneg %p119
      %p182 = pneg %p116
      %p183 = scmp.lt.s32.totalorder %s18, 1
      %s184 = scalar_select %p183, %s18, 1
      %p185 = scmp.lt.s32.totalorder %s19, 0
      %s186 = scalar_select %p185, %s19, 0
      %s187 = sadd.s32 %s186, %s184
      %s188 = smul.addr %s187, 4
      %s189 = scalar_lea.vmem %s3, %s188
      %s190 = smul.u32 8, %s19
      %p191 = scmp.lt.s32.totalorder %s18, 1
      %s192 = scalar_select %p191, %s18, 1
      %p193 = scmp.lt.s32.totalorder %s190, 7
      %s194 = scalar_select %p193, %s190, 7
      %s195 = smul.addr %s194, 2
      %s196 = smul.addr %s192, 16
      %s197 = sadd.s32 %s195, %s196
      %s198 = smul.addr %s197, 8
      %s199 = scalar_lea.vmem %s0, %s198
      %s200 = smul.u32 8, %s19
      %p201 = scmp.lt.s32.totalorder %s18, 1
      %s202 = scalar_select %p201, %s18, 1
      %p203 = scmp.lt.s32.totalorder %s19, 0
      %s204 = scalar_select %p203, %s19, 0
      %s205 = sadd.s32 %s204, %s202
      %s206 = smul.addr %s205, 4
      %s207 = scalar_lea.vmem %s3, %s206
      %v208 = vld [vmem:[%s199] sm:$0xff]
      %v209 = vld [vmem:[%s199 + $0x10] sm:$0xff]
      %v210 = vld [vmem:[%s199 + $0x20] sm:$0xff]
      %v211 = vld [vmem:[%s199 + $0x30] sm:$0xff]
      %v212 = vld [vmem:[%s199 + $0x40] sm:$0xff]
      %v213 = vld [vmem:[%s199 + $0x50] sm:$0xff]
      %v214 = vld [vmem:[%s199 + $0x60] sm:$0xff]
      %v215 = vld [vmem:[%s199 + $0x70] sm:$0xff]
      %s216 = scalar_lea.vmem %s199, 8
      %v217 = vld [vmem:[%s216] sm:$0xff]
      %v218 = vld [vmem:[%s216 + $0x10] sm:$0xff]
      %v219 = vld [vmem:[%s216 + $0x20] sm:$0xff]
      %v220 = vld [vmem:[%s216 + $0x30] sm:$0xff]
      %v221 = vld [vmem:[%s216 + $0x40] sm:$0xff]
      %v222 = vld [vmem:[%s216 + $0x50] sm:$0xff]
      %v223 = vld [vmem:[%s216 + $0x60] sm:$0xff]
      %v224 = vld [vmem:[%s216 + $0x70] sm:$0xff]
      %v225 = vld [vmem:[%s1] sm:$0xff]
      %s226 = scalar_lea.vmem %s1, 8
      %v227 = vld [vmem:[%s226] sm:$0xff]
      %vm228 = vcmask 64512
      %v230 = vsel %vm228, %v217, 0
      %v233 = vsel %vm228, %v218, 0
      %v236 = vsel %vm228, %v219, 0
      %v239 = vsel %vm228, %v220, 0
      %v242 = vsel %vm228, %v221, 0
      %v245 = vsel %vm228, %v222, 0
      %v248 = vsel %vm228, %v223, 0
      %v251 = vsel %vm228, %v224, 0
      %253 = vmatprep.subr.mxu0 0.0
      %254 = vmatpush1.msra.mxu0 0.0
      %255 = vmatprep.subr.mxu0 0.0
      %256 = vmatpush1.msra.mxu0 0.0
      %257 = vmatprep.subr.mxu0 0.0
      %258 = vmatpush1.msra.mxu0 0.0
      %259 = vmatprep.subr.mxu0 0.0
      %260 = vmatpush1.msra.mxu0 0.0
      %261 = vmatprep.subr.mxu0 0.0
      %262 = vmatpush1.msra.mxu0 0.0
      %263 = vmatprep.subr.mxu0 0.0
      %264 = vmatpush1.msra.mxu0 0.0
      %265 = vmatprep.subr.mxu0 0.0
      %266 = vmatpush1.msra.mxu0 0.0
      %267 = vmatprep.subr.mxu0 0.0
      %268 = vmatpush1.msra.mxu0 0.0
      %269 = vmatprep.subr.mxu0 0.0
      %270 = vmatpush1.msra.mxu0 0.0
      %271 = vmatprep.subr.mxu0 0.0
      %272 = vmatpush1.msra.mxu0 0.0
      %273 = vmatprep.subr.mxu0 0.0
      %274 = vmatpush1.msra.mxu0 0.0
      %275 = vmatprep.subr.mxu0 0.0
      %276 = vmatpush1.msra.mxu0 0.0
      %277 = vmatprep.subr.mxu0 0.0
      %278 = vmatpush1.msra.mxu0 0.0
      %279 = vmatprep.subr.mxu0 0.0
      %280 = vmatpush1.msra.mxu0 0.0
      %281 = vmatprep.subr.mxu0 0.0
      %282 = vmatpush1.msra.mxu0 0.0
      %283 = vmatprep.subr.mxu0 0.0
      %284 = vmatpush1.msra.mxu0 %v227
      %285 = vmatprep.subr.mxu0 0.0
      %286 = vmatpush2.msra.mxu0 0.0
      %287 = vmatprep.subr.mxu0 0.0
      %288 = vmatpush2.msra.mxu0 0.0
      %289 = vmatprep.subr.mxu0 0.0
      %290 = vmatpush2.msra.mxu0 0.0
      %291 = vmatprep.subr.mxu0 0.0
      %292 = vmatpush2.msra.mxu0 0.0
      %293 = vmatprep.subr.mxu0 0.0
      %294 = vmatpush2.msra.mxu0 0.0
      %295 = vmatprep.subr.mxu0 0.0
      %296 = vmatpush2.msra.mxu0 0.0
      %297 = vmatprep.subr.mxu0 0.0
      %298 = vmatpush2.msra.mxu0 0.0
      %299 = vmatprep.subr.mxu0 0.0
      %300 = vmatpush2.msra.mxu0 0.0
      %301 = vmatprep.subr.mxu0 0.0
      %302 = vmatpush2.msra.mxu0 0.0
      %303 = vmatprep.subr.mxu0 0.0
      %304 = vmatpush2.msra.mxu0 0.0
      %305 = vmatprep.subr.mxu0 0.0
      %306 = vmatpush2.msra.mxu0 0.0
      %307 = vmatprep.subr.mxu0 0.0
      %308 = vmatpush2.msra.mxu0 0.0
      %309 = vmatprep.subr.mxu0 0.0
      %310 = vmatpush2.msra.mxu0 0.0
      %311 = vmatprep.subr.mxu0 0.0
      %312 = vmatpush2.msra.mxu0 0.0
      %313 = vmatprep.subr.mxu0 0.0
      %314 = vmatpush2.msra.mxu0 0.0
      %315 = vmatprep.subr.mxu0 0.0
      %316 = vmatpush2.msra.mxu0 0.0
      %317 = vmatprep.mubr.f32.mxu0 0.0
      %318 = vmatmul.mubr.f32.gmra.mxu0 %v230
      %v319 = vpop.f32.mrf.mxu0
      %v320 = vadd.f32 0.0, %v319
      %v321 = vpop.f32.mrf.mxu0
      %322 = vmatprep.mubr.f32.mxu0 0.0
      %323 = vmatmul.mubr.f32.gmra.mxu0 %v233
      %v324 = vpop.f32.mrf.mxu0
      %v325 = vadd.f32 0.0, %v324
      %v326 = vpop.f32.mrf.mxu0
      %327 = vmatprep.mubr.f32.mxu0 0.0
      %328 = vmatmul.mubr.f32.gmra.mxu0 %v236
      %v329 = vpop.f32.mrf.mxu0
      %v330 = vadd.f32 0.0, %v329
      %v331 = vpop.f32.mrf.mxu0
      %332 = vmatprep.mubr.f32.mxu0 0.0
      %333 = vmatmul.mubr.f32.gmra.mxu0 %v239
      %v334 = vpop.f32.mrf.mxu0
      %v335 = vadd.f32 0.0, %v334
      %v336 = vpop.f32.mrf.mxu0
      %337 = vmatprep.mubr.f32.mxu0 0.0
      %338 = vmatmul.mubr.f32.gmra.mxu0 %v242
      %v339 = vpop.f32.mrf.mxu0
      %v340 = vadd.f32 0.0, %v339
      %v341 = vpop.f32.mrf.mxu0
      %342 = vmatprep.mubr.f32.mxu0 0.0
      %343 = vmatmul.mubr.f32.gmra.mxu0 %v245
      %v344 = vpop.f32.mrf.mxu0
      %v345 = vadd.f32 0.0, %v344
      %v346 = vpop.f32.mrf.mxu0
      %347 = vmatprep.mubr.f32.mxu0 0.0
      %348 = vmatmul.mubr.f32.gmra.mxu0 %v248
      %v349 = vpop.f32.mrf.mxu0
      %v350 = vadd.f32 0.0, %v349
      %v351 = vpop.f32.mrf.mxu0
      %352 = vmatprep.mubr.f32.mxu0 0.0
      %353 = vmatmul.mubr.f32.gmra.mxu0 %v251
      %v354 = vpop.f32.mrf.mxu0
      %v355 = vadd.f32 0.0, %v354
      %v356 = vpop.f32.mrf.mxu0
      %357 = vdwg.mxu0
      %v359 = vsel %vm228, %v208, 0
      %v362 = vsel %vm228, %v209, 0
      %v365 = vsel %vm228, %v210, 0
      %v368 = vsel %vm228, %v211, 0
      %v371 = vsel %vm228, %v212, 0
      %v374 = vsel %vm228, %v213, 0
      %v377 = vsel %vm228, %v214, 0
      %v380 = vsel %vm228, %v215, 0
      %382 = vmatprep.subr.mxu0 0.0
      %383 = vmatpush1.msra.mxu0 0.0
      %384 = vmatprep.subr.mxu0 0.0
      %385 = vmatpush1.msra.mxu0 0.0
      %386 = vmatprep.subr.mxu0 0.0
      %387 = vmatpush1.msra.mxu0 0.0
      %388 = vmatprep.subr.mxu0 0.0
      %389 = vmatpush1.msra.mxu0 0.0
      %390 = vmatprep.subr.mxu0 0.0
      %391 = vmatpush1.msra.mxu0 0.0
      %392 = vmatprep.subr.mxu0 0.0
      %393 = vmatpush1.msra.mxu0 0.0
      %394 = vmatprep.subr.mxu0 0.0
      %395 = vmatpush1.msra.mxu0 0.0
      %396 = vmatprep.subr.mxu0 0.0
      %397 = vmatpush1.msra.mxu0 0.0
      %398 = vmatprep.subr.mxu0 0.0
      %399 = vmatpush1.msra.mxu0 0.0
      %400 = vmatprep.subr.mxu0 0.0
      %401 = vmatpush1.msra.mxu0 0.0
      %402 = vmatprep.subr.mxu0 0.0
      %403 = vmatpush1.msra.mxu0 0.0
      %404 = vmatprep.subr.mxu0 0.0
      %405 = vmatpush1.msra.mxu0 0.0
      %406 = vmatprep.subr.mxu0 0.0
      %407 = vmatpush1.msra.mxu0 0.0
      %408 = vmatprep.subr.mxu0 0.0
      %409 = vmatpush1.msra.mxu0 0.0
      %410 = vmatprep.subr.mxu0 0.0
      %411 = vmatpush1.msra.mxu0 0.0
      %412 = vmatprep.subr.mxu0 0.0
      %413 = vmatpush1.msra.mxu0 %v225
      %414 = vmatprep.subr.mxu0 0.0
      %415 = vmatpush2.msra.mxu0 0.0
      %416 = vmatprep.subr.mxu0 0.0
      %417 = vmatpush2.msra.mxu0 0.0
      %418 = vmatprep.subr.mxu0 0.0
      %419 = vmatpush2.msra.mxu0 0.0
      %420 = vmatprep.subr.mxu0 0.0
      %421 = vmatpush2.msra.mxu0 0.0
      %422 = vmatprep.subr.mxu0 0.0
      %423 = vmatpush2.msra.mxu0 0.0
      %424 = vmatprep.subr.mxu0 0.0
      %425 = vmatpush2.msra.mxu0 0.0
      %426 = vmatprep.subr.mxu0 0.0
      %427 = vmatpush2.msra.mxu0 0.0
      %428 = vmatprep.subr.mxu0 0.0
      %429 = vmatpush2.msra.mxu0 0.0
      %430 = vmatprep.subr.mxu0 0.0
      %431 = vmatpush2.msra.mxu0 0.0
      %432 = vmatprep.subr.mxu0 0.0
      %433 = vmatpush2.msra.mxu0 0.0
      %434 = vmatprep.subr.mxu0 0.0
      %435 = vmatpush2.msra.mxu0 0.0
      %436 = vmatprep.subr.mxu0 0.0
      %437 = vmatpush2.msra.mxu0 0.0
      %438 = vmatprep.subr.mxu0 0.0
      %439 = vmatpush2.msra.mxu0 0.0
      %440 = vmatprep.subr.mxu0 0.0
      %441 = vmatpush2.msra.mxu0 0.0
      %442 = vmatprep.subr.mxu0 0.0
      %443 = vmatpush2.msra.mxu0 0.0
      %444 = vmatprep.subr.mxu0 0.0
      %445 = vmatpush2.msra.mxu0 0.0
      %446 = vmatprep.mubr.f32.mxu0 0.0
      %447 = vmatmul.mubr.f32.gmra.mxu0 %v359
      %v448 = vpop.f32.mrf.mxu0
      %v449 = vadd.f32 %v320, %v448
      %v450 = vpop.f32.mrf.mxu0
      %451 = vmatprep.mubr.f32.mxu0 0.0
      %452 = vmatmul.mubr.f32.gmra.mxu0 %v362
      %v453 = vpop.f32.mrf.mxu0
      %v454 = vadd.f32 %v325, %v453
      %v455 = vpop.f32.mrf.mxu0
      %456 = vmatprep.mubr.f32.mxu0 0.0
      %457 = vmatmul.mubr.f32.gmra.mxu0 %v365
      %v458 = vpop.f32.mrf.mxu0
      %v459 = vadd.f32 %v330, %v458
      %v460 = vpop.f32.mrf.mxu0
      %461 = vmatprep.mubr.f32.mxu0 0.0
      %462 = vmatmul.mubr.f32.gmra.mxu0 %v368
      %v463 = vpop.f32.mrf.mxu0
      %v464 = vadd.f32 %v335, %v463
      %v465 = vpop.f32.mrf.mxu0
      %466 = vmatprep.mubr.f32.mxu0 0.0
      %467 = vmatmul.mubr.f32.gmra.mxu0 %v371
      %v468 = vpop.f32.mrf.mxu0
      %v469 = vadd.f32 %v340, %v468
      %v470 = vpop.f32.mrf.mxu0
      %471 = vmatprep.mubr.f32.mxu0 0.0
      %472 = vmatmul.mubr.f32.gmra.mxu0 %v374
      %v473 = vpop.f32.mrf.mxu0
      %v474 = vadd.f32 %v345, %v473
      %v475 = vpop.f32.mrf.mxu0
      %476 = vmatprep.mubr.f32.mxu0 0.0
      %477 = vmatmul.mubr.f32.gmra.mxu0 %v377
      %v478 = vpop.f32.mrf.mxu0
      %v479 = vadd.f32 %v350, %v478
      %v480 = vpop.f32.mrf.mxu0
      %481 = vmatprep.mubr.f32.mxu0 0.0
      %482 = vmatmul.mubr.f32.gmra.mxu0 %v380
      %v483 = vpop.f32.mrf.mxu0
      %v484 = vadd.f32 %v355, %v483
      %v485 = vpop.f32.mrf.mxu0
      %486 = vdwg.mxu0
      %v487 = vld [vmem:[%s2] sm:$0x1]
      %v489 = vlaneseq
      %v490 = vshrl.u32 %v489, 7
      %v491 = vsub.s32 0, %v490
      %v492 = vrot.slane %v487, %v491
      %v494 = vadd.f32 %v449, %v492
      %v495 = vadd.f32 %v454, %v492
      %v496 = vadd.f32 %v459, %v492
      %v497 = vadd.f32 %v464, %v492
      %v498 = vadd.f32 %v469, %v492
      %v499 = vadd.f32 %v474, %v492
      %v500 = vadd.f32 %v479, %v492
      %v501 = vadd.f32 %v484, %v492
      %502 = vxpose.xlu0.b32.start [1/16] %v494, 128
      %503 = vxpose.xlu0.b32.cont [2/16] %v495, 128
      %504 = vxpose.xlu0.b32.cont [3/16] %v496, 128
      %505 = vxpose.xlu0.b32.cont [4/16] %v497, 128
      %506 = vxpose.xlu0.b32.cont [5/16] %v498, 128
      %507 = vxpose.xlu0.b32.cont [6/16] %v499, 128
      %508 = vxpose.xlu0.b32.cont [7/16] %v500, 128
      %509 = vxpose.xlu0.b32.cont [8/16] %v501, 128
      %510 = vxpose.xlu0.b32.cont [9/16] 0.0, 128
      %511 = vxpose.xlu0.b32.cont [10/16] 0.0, 128
      %512 = vxpose.xlu0.b32.cont [11/16] 0.0, 128
      %513 = vxpose.xlu0.b32.cont [12/16] 0.0, 128
      %514 = vxpose.xlu0.b32.cont [13/16] 0.0, 128
      %515 = vxpose.xlu0.b32.cont [14/16] 0.0, 128
      %516 = vxpose.xlu0.b32.cont [15/16] 0.0, 128
      %517 = vxpose.xlu0.b32.end [16/16] 0.0, 128
      %v518 = vpop.trf.xlu0
      %v519 = vpop.trf.xlu0
      %v520 = vpop.trf.xlu0
      %v521 = vpop.trf.xlu0
      %v522 = vpop.trf.xlu0
      %v523 = vpop.trf.xlu0
      %v524 = vpop.trf.xlu0
      %v525 = vpop.trf.xlu0
      %v526 = vpop.trf.xlu0
      %v527 = vpop.trf.xlu0
      %v528 = vpop.trf.xlu0
      %v529 = vpop.trf.xlu0
      %v530 = vpop.trf.xlu0
      %v531 = vpop.trf.xlu0
      %v532 = vpop.trf.xlu0
      %v533 = vpop.trf.xlu0
      %vm534 = vcmask 519168
      %535 = vst.msk [vmem:[%s207] sm:$0xf] %vm534, %v518
      %p536 = scmp.lt.s32.totalorder %s18, 1
      %s537 = scalar_select %p536, %s18, 1
      %p538 = scmp.lt.s32.totalorder %s19, 0
      %s539 = scalar_select %p538, %s19, 0
      %s540 = sadd.s32 %s539, %s537
      %s541 = smul.addr %s540, 4
      %s542 = scalar_lea.vmem %s3, %s541
      // Predicated region
      $region33: #{downsample.1} parent=31 // pred_check
        %p543 = pneg %p116
      $region34: #{downsample.1} parent=31 // pred_check_branch
        %545 = sbr.rel (%p543) target = $region36
      $region35: #{downsample.1} parent=31 // pred_region
        _
      $region36: #{downsample.1} parent=31 // pred_fallthru
        _
    $region32: #{downsample.1} parent=5 // pred_fallthru
      _
    %p546 = scmp.le.s32.totalorder 2, %s9
    // Predicated region
    $region37: #{downsample.1} parent=5 // pred_check
      %p547 = pneg %p546
    $region38: #{downsample.1} parent=5 // pred_check_branch
      %549 = sbr.rel (%p547) target = $region40
    $region39: #{downsample.1} parent=5 // pred_region
      %s550 = ssub.s32 %s9, 2
      // Predicated region
      $region41: #{downsample.1} parent=39 // pred_check
        %p551 = pneg %p122
      $region42: #{downsample.1} parent=39 // pred_check_branch
        %553 = sbr.rel (%p551) target = $region44
      $region43: #{downsample.1} parent=39 // pred_region
        %p554 = scmp.lt.s32.totalorder %s20, 1
        %s555 = scalar_select %p554, %s20, 1
        %p556 = scmp.lt.s32.totalorder %s21, 0
        %s557 = scalar_select %p556, %s21, 0
        %s558 = sadd.s32 %s557, %s555
        %s559 = smul.addr %s558, 4
        %s560 = scalar_lea.vmem %s3, %s559
      $region44: #{downsample.1} parent=39 // pred_fallthru
        _
    $region40: #{downsample.1} parent=5 // pred_fallthru
      _
  $region6: #{downsample.1} parent=0 // loop_footer
    %s13 = sadd.s32 1, %s9
  $region7: #{downsample.1} parent=0 // loop_footer_branch
    %8 = sbr.rel target = $region3
  $region8: #{downsample.1} parent=0 // loop_exit
    _

</llo_original>
